<compile_context>
chip_gen: v5e
topology: v5e:2x2
jax: 0.10.0
libtpu: 0.0.40
codegen_flags: <defaults>
</compile_context>

<pallas_src>
import functools

import jax
import jax.numpy as jnp
from jax.experimental import pallas as pl
from jax.experimental.pallas import tpu as pltpu


def _round_up(n, m):
    return ((n + m - 1) // m) * m


def _mlp_kernel(x_ref, w1_ref, b1_ref, w2_ref, b2_ref, w3_ref, b3_ref, o_ref):
    """Fused forward for one (block_b, E) batch tile; weights stay VMEM-resident."""
    mm_dtype = w1_ref.dtype
    # nn.ReLU() applied to the input first.
    x = jnp.maximum(x_ref[...], 0.0)
    # Linear(E, H1) + ReLU: bf16 (or f32) MXU matmul, f32 accumulate, f32 epilogue.
    # Each bias broadcast happens exactly once per grid step (no in-kernel loop),
    # so there is nothing further to hoist.
    h = jnp.dot(x, w1_ref[...], preferred_element_type=jnp.float32)
    h = jnp.maximum(h + b1_ref[...], 0.0)
    # Linear(H1, H1 // 2) + ReLU.
    h = jnp.dot(h.astype(mm_dtype), w2_ref[...], preferred_element_type=jnp.float32)
    h = jnp.maximum(h + b2_ref[...], 0.0)
    # Final Linear(H1 // 2, H2) (no ReLU).
    out = jnp.dot(h.astype(mm_dtype), w3_ref[...], preferred_element_type=jnp.float32)
    o_ref[...] = (out + b3_ref[...]).astype(o_ref.dtype)


@functools.partial(jax.jit, static_argnames=("block_b", "matmul_dtype"))
def common_net_forward(x, w1, b1, w2, b2, w3, b3, *, block_b=256,
                       matmul_dtype=jnp.bfloat16):
    """x: (B, embedding_dim). wN: (in, out) pre-transposed. bN: (1, out)."""
    B, E = x.shape
    H1, H1h, H2 = w1.shape[1], w2.shape[1], w3.shape[1]
    out_dtype = x.dtype
    f32 = jnp.float32

    LANE, SUB = 128, 8
    # Lane-dense feature dims: pad everything to multiples of 128.
    E_p, H1_p, H1h_p, H2_p = (_round_up(d, LANE) for d in (E, H1, H1h, H2))

    # Batch tile: as large as requested but never larger than the (8-aligned)
    # batch; pad the batch so the grid divides evenly (no tail assert).
    bb = max(SUB, min(_round_up(block_b, SUB), _round_up(B, SUB)))
    B_p = _round_up(B, bb)
    grid = (B_p // bb,)

    # Zero-pad operands (exact) and cast matmul operands to the MXU dtype.
    xp = jnp.pad(x, ((0, B_p - B), (0, E_p - E))).astype(matmul_dtype)
    w1p = jnp.pad(w1, ((0, E_p - E), (0, H1_p - H1))).astype(matmul_dtype)
    w2p = jnp.pad(w2, ((0, H1_p - H1), (0, H1h_p - H1h))).astype(matmul_dtype)
    w3p = jnp.pad(w3, ((0, H1h_p - H1h), (0, H2_p - H2))).astype(matmul_dtype)
    b1p = jnp.pad(b1, ((0, 0), (0, H1_p - H1))).astype(f32)
    b2p = jnp.pad(b2, ((0, 0), (0, H1h_p - H1h))).astype(f32)
    b3p = jnp.pad(b3, ((0, 0), (0, H2_p - H2))).astype(f32)

    # Grid-invariant operands: single VMEM buffer (they never re-DMA).
    def const_spec(shape):
        return pl.BlockSpec(shape, lambda i: (0, 0), pipeline_mode=pl.Buffered(1))

    # Explicit VMEM budget: double-buffered x/out, single-buffered weights,
    # f32 + matmul-dtype intermediates; generous headroom, capped at 64 MiB
    # (v7x per-TC physical VMEM).
    mm_b, acc_b = jnp.dtype(matmul_dtype).itemsize, 4
    vmem_bytes = (
        2 * bb * E_p * mm_b                                    # x (double buffer)
        + 2 * bb * H2_p * acc_b                                # out (double buffer)
        + (E_p * H1_p + H1_p * H1h_p + H1h_p * H2_p) * mm_b    # weights (1 buffer)
        + (H1_p + H1h_p + H2_p) * acc_b                        # biases
        + bb * (H1_p + H1h_p) * (acc_b + mm_b)                 # intermediates
    )
    vmem_limit = int(min(max(4 * vmem_bytes, 16 << 20), 64 << 20))

    out_p = pl.pallas_call(
        _mlp_kernel,
        out_shape=jax.ShapeDtypeStruct((B_p, H2_p), f32),
        grid_spec=pltpu.PrefetchScalarGridSpec(
            num_scalar_prefetch=0,
            grid=grid,
            in_specs=[
                pl.BlockSpec((bb, E_p), lambda i: (i, 0)),          # x tile
                const_spec((E_p, H1_p)), const_spec((1, H1_p)),     # layer 1
                const_spec((H1_p, H1h_p)), const_spec((1, H1h_p)),  # layer 2
                const_spec((H1h_p, H2_p)), const_spec((1, H2_p)),   # layer 3
            ],
            out_specs=pl.BlockSpec((bb, H2_p), lambda i: (i, 0)),
        ),
        compiler_params=pltpu.CompilerParams(
            dimension_semantics=("parallel",),
            vmem_limit_bytes=vmem_limit,
        ),
    )(xp, w1p, b1p, w2p, b2p, w3p, b3p)

    # Slice away batch / lane padding.
    return out_p[:B, :H2].astype(out_dtype)


def init_params(key, embedding_dim, hidden_1, hidden_2, dtype=jnp.float32):
    """Deterministic synthetic parameters matching nn.Linear shapes.

    PyTorch nn.Linear(in, out) has weight (out, in); we store the transpose
    (in, out) so the kernel does x @ W."""
    dims = [(embedding_dim, hidden_1), (hidden_1, hidden_1 // 2),
            (hidden_1 // 2, hidden_2)]
    params = []
    for (fan_in, fan_out) in dims:
        key, kw, kb = jax.random.split(key, 3)
        bound = 1.0 / (fan_in ** 0.5)
        w = jax.random.uniform(kw, (fan_in, fan_out), dtype, -bound, bound)
        b = jax.random.uniform(kb, (1, fan_out), dtype, -bound, bound)
        params += [w, b]
    return params


def reference_forward(x, w1, b1, w2, b2, w3, b3):
    h = jnp.maximum(x, 0.0)
    h = jnp.maximum(h @ w1 + b1, 0.0)
    h = jnp.maximum(h @ w2 + b2, 0.0)
    return h @ w3 + b3


if __name__ == "__main__":
    embedding_dim, hidden_1, hidden_2 = 32, 64, 16

    key = jax.random.PRNGKey(0)
    key, kx = jax.random.split(key)
    params = init_params(key, embedding_dim, hidden_1, hidden_2)

    # Small demo batch (f32 strict + bf16 loose), plus a non-multiple batch
    # exercising the padded-tail / multi-step-grid path.
    checks = (
        (8, jnp.float32, 1e-4),
        (8, jnp.bfloat16, 5e-2),
        (260, jnp.bfloat16, 5e-2),
    )
    for batch, mm_dtype, tol in checks:
        xkey = jax.random.fold_in(kx, batch)
        x = jax.random.normal(xkey, (batch, embedding_dim), jnp.float32)
        out = jax.block_until_ready(
            common_net_forward(x, *params, matmul_dtype=mm_dtype))
        ref = reference_forward(x, *params)
        assert out.shape == (batch, hidden_2)
        assert jnp.allclose(out, ref, atol=tol, rtol=tol), (
            f"mismatch vs reference (batch={batch}, matmul_dtype={mm_dtype})")

    print("KERNEL_OK")
</pallas_src>

<mosaic_0001>
module attributes {stable_mosaic.version = 11 : i64} {
  func.func @_mlp_kernel(%arg0: i32, %arg1: memref<8x128xf32, #tpu.memory_space<vmem>>, %arg2: memref<128x128xf32, #tpu.memory_space<vmem>>, %arg3: memref<1x128xf32, #tpu.memory_space<vmem>>, %arg4: memref<128x128xf32, #tpu.memory_space<vmem>>, %arg5: memref<1x128xf32, #tpu.memory_space<vmem>>, %arg6: memref<128x128xf32, #tpu.memory_space<vmem>>, %arg7: memref<1x128xf32, #tpu.memory_space<vmem>>, %arg8: memref<8x128xf32, #tpu.memory_space<vmem>>) attributes {dimension_semantics = [#tpu.dimension_semantics<parallel>], iteration_bounds = array<i64: 1>, scalar_prefetch = 0 : i64, scratch_operands = 0 : i64, tpu.core_type = #tpu.core_type<tc>, window_params = [{transform_indices = @transform_0, window_bounds = array<i64: 8, 128>}, {pipeline_mode = #tpu.pipeline_mode<synchronous>, transform_indices = @transform_1, window_bounds = array<i64: 128, 128>}, {pipeline_mode = #tpu.pipeline_mode<synchronous>, transform_indices = @transform_2, window_bounds = array<i64: 1, 128>}, {pipeline_mode = #tpu.pipeline_mode<synchronous>, transform_indices = @transform_3, window_bounds = array<i64: 128, 128>}, {pipeline_mode = #tpu.pipeline_mode<synchronous>, transform_indices = @transform_4, window_bounds = array<i64: 1, 128>}, {pipeline_mode = #tpu.pipeline_mode<synchronous>, transform_indices = @transform_5, window_bounds = array<i64: 128, 128>}, {pipeline_mode = #tpu.pipeline_mode<synchronous>, transform_indices = @transform_6, window_bounds = array<i64: 1, 128>}, {transform_indices = @transform_7, window_bounds = array<i64: 8, 128>}]} {
    %c0 = arith.constant 0 : index
    %c0_0 = arith.constant 0 : index
    %0 = vector.load %arg1[%c0, %c0_0] : memref<8x128xf32, #tpu.memory_space<vmem>>, vector<8x128xf32>
    %cst = arith.constant 0.000000e+00 : f32
    %1 = vector.broadcast %cst : f32 to vector<8x128xf32>
    %2 = arith.maximumf %0, %1 : vector<8x128xf32>
    %c0_1 = arith.constant 0 : index
    %c0_2 = arith.constant 0 : index
    %3 = vector.load %arg2[%c0_1, %c0_2] : memref<128x128xf32, #tpu.memory_space<vmem>>, vector<128x128xf32>
    %cst_3 = arith.constant dense<0.000000e+00> : vector<8x128xf32>
    %4 = tpu.matmul %2, %3, %cst_3 {dimension_numbers = #tpu.dot_dimension_numbers<[1], [0], [0], [1], [0, 0, 1, 1], [], []>} : vector<8x128xf32>, vector<128x128xf32>, vector<8x128xf32> -> vector<8x128xf32>
    %c0_4 = arith.constant 0 : index
    %c0_5 = arith.constant 0 : index
    %5 = vector.load %arg3[%c0_4, %c0_5] : memref<1x128xf32, #tpu.memory_space<vmem>>, vector<1x128xf32>
    %6 = vector.broadcast %5 : vector<1x128xf32> to vector<8x128xf32>
    %7 = arith.addf %4, %6 : vector<8x128xf32>
    %cst_6 = arith.constant 0.000000e+00 : f32
    %8 = vector.broadcast %cst_6 : f32 to vector<8x128xf32>
    %9 = arith.maximumf %7, %8 : vector<8x128xf32>
    %c0_7 = arith.constant 0 : index
    %c0_8 = arith.constant 0 : index
    %10 = vector.load %arg4[%c0_7, %c0_8] : memref<128x128xf32, #tpu.memory_space<vmem>>, vector<128x128xf32>
    %cst_9 = arith.constant dense<0.000000e+00> : vector<8x128xf32>
    %11 = tpu.matmul %9, %10, %cst_9 {dimension_numbers = #tpu.dot_dimension_numbers<[1], [0], [0], [1], [0, 0, 1, 1], [], []>} : vector<8x128xf32>, vector<128x128xf32>, vector<8x128xf32> -> vector<8x128xf32>
    %c0_10 = arith.constant 0 : index
    %c0_11 = arith.constant 0 : index
    %12 = vector.load %arg5[%c0_10, %c0_11] : memref<1x128xf32, #tpu.memory_space<vmem>>, vector<1x128xf32>
    %13 = vector.broadcast %12 : vector<1x128xf32> to vector<8x128xf32>
    %14 = arith.addf %11, %13 : vector<8x128xf32>
    %cst_12 = arith.constant 0.000000e+00 : f32
    %15 = vector.broadcast %cst_12 : f32 to vector<8x128xf32>
    %16 = arith.maximumf %14, %15 : vector<8x128xf32>
    %c0_13 = arith.constant 0 : index
    %c0_14 = arith.constant 0 : index
    %17 = vector.load %arg6[%c0_13, %c0_14] : memref<128x128xf32, #tpu.memory_space<vmem>>, vector<128x128xf32>
    %cst_15 = arith.constant dense<0.000000e+00> : vector<8x128xf32>
    %18 = tpu.matmul %16, %17, %cst_15 {dimension_numbers = #tpu.dot_dimension_numbers<[1], [0], [0], [1], [0, 0, 1, 1], [], []>} : vector<8x128xf32>, vector<128x128xf32>, vector<8x128xf32> -> vector<8x128xf32>
    %c0_16 = arith.constant 0 : index
    %c0_17 = arith.constant 0 : index
    %19 = vector.load %arg7[%c0_16, %c0_17] : memref<1x128xf32, #tpu.memory_space<vmem>>, vector<1x128xf32>
    %20 = vector.broadcast %19 : vector<1x128xf32> to vector<8x128xf32>
    %21 = arith.addf %18, %20 : vector<8x128xf32>
    %c0_18 = arith.constant 0 : index
    %c0_19 = arith.constant 0 : index
    %22 = vector.load %arg8[%c0_18, %c0_19] : memref<8x128xf32, #tpu.memory_space<vmem>>, vector<8x128xf32>
    tpu.vector_store %arg8[%c0_18, %c0_19], %21 {strides = array<i32>} : memref<8x128xf32, #tpu.memory_space<vmem>>, vector<8x128xf32>,
    return
  }
  func.func @transform_0(%arg0: i32) -> (i32, i32) {
    %c0_i32 = arith.constant 0 : i32
    %c0_i32_0 = arith.constant 0 : i32
    return %arg0, %c0_i32 : i32, i32
  }
  func.func @transform_1(%arg0: i32) -> (i32, i32) {
    %c0_i32 = arith.constant 0 : i32
    %c0_i32_0 = arith.constant 0 : i32
    %c0_i32_1 = arith.constant 0 : i32
    return %c0_i32, %c0_i32_0 : i32, i32
  }
  func.func @transform_2(%arg0: i32) -> (i32, i32) {
    %c0_i32 = arith.constant 0 : i32
    %c0_i32_0 = arith.constant 0 : i32
    %c0_i32_1 = arith.constant 0 : i32
    return %c0_i32, %c0_i32_0 : i32, i32
  }
  func.func @transform_3(%arg0: i32) -> (i32, i32) {
    %c0_i32 = arith.constant 0 : i32
    %c0_i32_0 = arith.constant 0 : i32
    %c0_i32_1 = arith.constant 0 : i32
    return %c0_i32, %c0_i32_0 : i32, i32
  }
  func.func @transform_4(%arg0: i32) -> (i32, i32) {
    %c0_i32 = arith.constant 0 : i32
    %c0_i32_0 = arith.constant 0 : i32
    %c0_i32_1 = arith.constant 0 : i32
    return %c0_i32, %c0_i32_0 : i32, i32
  }
  func.func @transform_5(%arg0: i32) -> (i32, i32) {
    %c0_i32 = arith.constant 0 : i32
    %c0_i32_0 = arith.constant 0 : i32
    %c0_i32_1 = arith.constant 0 : i32
    return %c0_i32, %c0_i32_0 : i32, i32
  }
  func.func @transform_6(%arg0: i32) -> (i32, i32) {
    %c0_i32 = arith.constant 0 : i32
    %c0_i32_0 = arith.constant 0 : i32
    %c0_i32_1 = arith.constant 0 : i32
    return %c0_i32, %c0_i32_0 : i32, i32
  }
  func.func @transform_7(%arg0: i32) -> (i32, i32) {
    %c0_i32 = arith.constant 0 : i32
    %c0_i32_0 = arith.constant 0 : i32
    return %arg0, %c0_i32 : i32, i32
  }
}

</mosaic_0001>

<llo_original>
// kernel: common_net_forward.1
$region0: #{common_net_forward.1}
  #allocation0 [shape = 'u32[]', space=smem, size = 0x4, offset = 0x4, fixed_abs, tag = 'smem constant byte address 0x4 - core index']
  #allocation1 [shape = 'u32[72,128]{1,0:T(1,128)}', space=vmem, size = 0x9000, scoped, tag = 'internal scratch']
  %s0 = inlined_call_operand.vmem [shape: f32[8,128], index: 0, kind: input, shape index: {}]
  %s1 = inlined_call_operand.vmem [shape: f32[128,128], index: 1, kind: input, shape index: {}]
  %s2 = inlined_call_operand.vmem [shape: f32[1,128], index: 2, kind: input, shape index: {}]
  %s3 = inlined_call_operand.vmem [shape: f32[128,128], index: 3, kind: input, shape index: {}]
  %s4 = inlined_call_operand.vmem [shape: f32[1,128], index: 4, kind: input, shape index: {}]
  %s5 = inlined_call_operand.vmem [shape: f32[128,128], index: 5, kind: input, shape index: {}]
  %s6 = inlined_call_operand.vmem [shape: f32[1,128], index: 6, kind: input, shape index: {}]
  %s7 = inlined_call_operand.hbm [shape: f32[8,128], index: 7, kind: output, shape index: {}]
  %s8 = sld [smem:[#allocation0]]
  $region38: #{common_net_forward.1} parent=0
    _
  %s10 = ssub.s32 1, %s8
  %s11 = scalar_select 0, %s10, %s8
  $region1: #{common_net_forward.1} parent=0
    #allocation2 [shape = 'u8[4096]{0}', space=vmem, size = 0x1000, scoped, tag = 'output window, operand 0, single buffered']
    #allocation3 [shape = 's32[1]{0}', space=sflag, size = 0x4, scoped, tag = 'scoped memory for common_net_forward.1']
    %12 = vsyncpa [#allocation3], 0
    // Predicated region
    $region2: #{common_net_forward.1} parent=1 // pred_check
      _
    $region3: #{common_net_forward.1} parent=1 // pred_check_branch
      %14 = sbr.rel (0) target = $region5
    $region4: #{common_net_forward.1} parent=1 // pred_region
      _
    $region5: #{common_net_forward.1} parent=1 // pred_fallthru
      _
    // Predicated region
    $region6: #{common_net_forward.1} parent=1 // pred_check
      _
    $region7: #{common_net_forward.1} parent=1 // pred_check_branch
      %16 = sbr.rel (0) target = $region9
    $region8: #{common_net_forward.1} parent=1 // pred_region
      _
    $region9: #{common_net_forward.1} parent=1 // pred_fallthru
      _
    // Predicated region
    $region10: #{common_net_forward.1} parent=1 // pred_check
      _
    $region11: #{common_net_forward.1} parent=1 // pred_check_branch
      %18 = sbr.rel (0) target = $region13
    $region12: #{common_net_forward.1} parent=1 // pred_region
      _
    $region13: #{common_net_forward.1} parent=1 // pred_fallthru
      _
    // Predicated region
    $region14: #{common_net_forward.1} parent=1 // pred_check
      _
    $region15: #{common_net_forward.1} parent=1 // pred_check_branch
      %20 = sbr.rel (0) target = $region17
    $region16: #{common_net_forward.1} parent=1 // pred_region
      _
    $region17: #{common_net_forward.1} parent=1 // pred_fallthru
      _
    // Predicated region
    $region18: #{common_net_forward.1} parent=1 // pred_check
      _
    $region19: #{common_net_forward.1} parent=1 // pred_check_branch
      %22 = sbr.rel (0) target = $region21
    $region20: #{common_net_forward.1} parent=1 // pred_region
      _
    $region21: #{common_net_forward.1} parent=1 // pred_fallthru
      _
    // Predicated region
    $region22: #{common_net_forward.1} parent=1 // pred_check
      _
    $region23: #{common_net_forward.1} parent=1 // pred_check_branch
      %24 = sbr.rel (0) target = $region25
    $region24: #{common_net_forward.1} parent=1 // pred_region
      _
    $region25: #{common_net_forward.1} parent=1 // pred_fallthru
      _
    // Predicated region
    $region26: #{common_net_forward.1} parent=1 // pred_check
      _
    $region27: #{common_net_forward.1} parent=1 // pred_check_branch
      %26 = sbr.rel (0) target = $region29
    $region28: #{common_net_forward.1} parent=1 // pred_region
      _
    $region29: #{common_net_forward.1} parent=1 // pred_fallthru
      _
    %v27 = vld [vmem:[%s0] sm:$0xff]
    %v28 = vmax.f32 %v27, 0.0
    %v29 = vld [vmem:[%s1] sm:$0xff]
    %v30 = vld [vmem:[%s1 + $0x8] sm:$0xff]
    %v31 = vld [vmem:[%s1 + $0x10] sm:$0xff]
    %v32 = vld [vmem:[%s1 + $0x18] sm:$0xff]
    %v33 = vld [vmem:[%s1 + $0x20] sm:$0xff]
    %v34 = vld [vmem:[%s1 + $0x28] sm:$0xff]
    %v35 = vld [vmem:[%s1 + $0x30] sm:$0xff]
    %v36 = vld [vmem:[%s1 + $0x38] sm:$0xff]
    %v37 = vld [vmem:[%s1 + $0x40] sm:$0xff]
    %v38 = vld [vmem:[%s1 + $0x48] sm:$0xff]
    %v39 = vld [vmem:[%s1 + $0x50] sm:$0xff]
    %v40 = vld [vmem:[%s1 + $0x58] sm:$0xff]
    %v41 = vld [vmem:[%s1 + $0x60] sm:$0xff]
    %v42 = vld [vmem:[%s1 + $0x68] sm:$0xff]
    %v43 = vld [vmem:[%s1 + $0x70] sm:$0xff]
    %v44 = vld [vmem:[%s1 + $0x78] sm:$0xff]
    %v45 = vld [vmem:[%s2] sm:$0x1]
    %v47 = vperm.slane %v45, 0
    %49 = vmatpush.msra.mxu0 %v44
    %50 = vmatpush.msra.mxu0 %v43
    %51 = vmatpush.msra.mxu0 %v42
    %52 = vmatpush.msra.mxu0 %v41
    %53 = vmatpush.msra.mxu0 %v40
    %54 = vmatpush.msra.mxu0 %v39
    %55 = vmatpush.msra.mxu0 %v38
    %56 = vmatpush.msra.mxu0 %v37
    %57 = vmatpush.msra.mxu0 %v36
    %58 = vmatpush.msra.mxu0 %v35
    %59 = vmatpush.msra.mxu0 %v34
    %60 = vmatpush.msra.mxu0 %v33
    %61 = vmatpush.msra.mxu0 %v32
    %62 = vmatpush.msra.mxu0 %v31
    %63 = vmatpush.msra.mxu0 %v30
    %64 = vmatpush.msra.mxu0 %v29
    %65 = vmatmul.f32.gmra.mxu0 %v28
    %v66 = vpop.f32.mrf.mxu0
    %v67 = vadd.f32 %v47, %v66
    %68 = vdwg.mxu0
    %v69 = vmax.f32 %v67, 0.0
    %v70 = vld [vmem:[%s3] sm:$0xff]
    %v71 = vld [vmem:[%s3 + $0x8] sm:$0xff]
    %v72 = vld [vmem:[%s3 + $0x10] sm:$0xff]
    %v73 = vld [vmem:[%s3 + $0x18] sm:$0xff]
    %v74 = vld [vmem:[%s3 + $0x20] sm:$0xff]
    %v75 = vld [vmem:[%s3 + $0x28] sm:$0xff]
    %v76 = vld [vmem:[%s3 + $0x30] sm:$0xff]
    %v77 = vld [vmem:[%s3 + $0x38] sm:$0xff]
    %v78 = vld [vmem:[%s3 + $0x40] sm:$0xff]
    %v79 = vld [vmem:[%s3 + $0x48] sm:$0xff]
    %v80 = vld [vmem:[%s3 + $0x50] sm:$0xff]
    %v81 = vld [vmem:[%s3 + $0x58] sm:$0xff]
    %v82 = vld [vmem:[%s3 + $0x60] sm:$0xff]
    %v83 = vld [vmem:[%s3 + $0x68] sm:$0xff]
    %v84 = vld [vmem:[%s3 + $0x70] sm:$0xff]
    %v85 = vld [vmem:[%s3 + $0x78] sm:$0xff]
    %v86 = vld [vmem:[%s4] sm:$0x1]
    %v88 = vperm.slane %v86, 0
    %90 = vmatpush.msra.mxu0 %v85
    %91 = vmatpush.msra.mxu0 %v84
    %92 = vmatpush.msra.mxu0 %v83
    %93 = vmatpush.msra.mxu0 %v82
    %94 = vmatpush.msra.mxu0 %v81
    %95 = vmatpush.msra.mxu0 %v80
    %96 = vmatpush.msra.mxu0 %v79
    %97 = vmatpush.msra.mxu0 %v78
    %98 = vmatpush.msra.mxu0 %v77
    %99 = vmatpush.msra.mxu0 %v76
    %100 = vmatpush.msra.mxu0 %v75
    %101 = vmatpush.msra.mxu0 %v74
    %102 = vmatpush.msra.mxu0 %v73
    %103 = vmatpush.msra.mxu0 %v72
    %104 = vmatpush.msra.mxu0 %v71
    %105 = vmatpush.msra.mxu0 %v70
    %106 = vmatmul.f32.gmra.mxu0 %v69
    %v107 = vpop.f32.mrf.mxu0
    %v108 = vadd.f32 %v88, %v107
    %109 = vdwg.mxu0
    %v110 = vmax.f32 %v108, 0.0
    %v111 = vld [vmem:[%s5] sm:$0xff]
    %v112 = vld [vmem:[%s5 + $0x8] sm:$0xff]
    %v113 = vld [vmem:[%s5 + $0x10] sm:$0xff]
    %v114 = vld [vmem:[%s5 + $0x18] sm:$0xff]
    %v115 = vld [vmem:[%s5 + $0x20] sm:$0xff]
    %v116 = vld [vmem:[%s5 + $0x28] sm:$0xff]
    %v117 = vld [vmem:[%s5 + $0x30] sm:$0xff]
    %v118 = vld [vmem:[%s5 + $0x38] sm:$0xff]
    %v119 = vld [vmem:[%s5 + $0x40] sm:$0xff]
    %v120 = vld [vmem:[%s5 + $0x48] sm:$0xff]
    %v121 = vld [vmem:[%s5 + $0x50] sm:$0xff]
    %v122 = vld [vmem:[%s5 + $0x58] sm:$0xff]
    %v123 = vld [vmem:[%s5 + $0x60] sm:$0xff]
    %v124 = vld [vmem:[%s5 + $0x68] sm:$0xff]
    %v125 = vld [vmem:[%s5 + $0x70] sm:$0xff]
    %v126 = vld [vmem:[%s5 + $0x78] sm:$0xff]
    %v127 = vld [vmem:[%s6] sm:$0x1]
    %v129 = vperm.slane %v127, 0
    %131 = vmatpush.msra.mxu0 %v126
    %132 = vmatpush.msra.mxu0 %v125
    %133 = vmatpush.msra.mxu0 %v124
    %134 = vmatpush.msra.mxu0 %v123
    %135 = vmatpush.msra.mxu0 %v122
    %136 = vmatpush.msra.mxu0 %v121
    %137 = vmatpush.msra.mxu0 %v120
    %138 = vmatpush.msra.mxu0 %v119
    %139 = vmatpush.msra.mxu0 %v118
    %140 = vmatpush.msra.mxu0 %v117
    %141 = vmatpush.msra.mxu0 %v116
    %142 = vmatpush.msra.mxu0 %v115
    %143 = vmatpush.msra.mxu0 %v114
    %144 = vmatpush.msra.mxu0 %v113
    %145 = vmatpush.msra.mxu0 %v112
    %146 = vmatpush.msra.mxu0 %v111
    %147 = vmatmul.f32.gmra.mxu0 %v110
    %v148 = vpop.f32.mrf.mxu0
    %v149 = vadd.f32 %v129, %v148
    %150 = vdwg.mxu0
    %151 = vst [vmem:[#allocation2] sm:$0xff] %v149
    // Predicated region
    $region30: #{common_net_forward.1} parent=1 // pred_check
      _
    $region31: #{common_net_forward.1} parent=1 // pred_check_branch
      %153 = sbr.rel (0) target = $region33
    $region32: #{common_net_forward.1} parent=1 // pred_region
      %155 = vsyncadd [#allocation3], 0
      %s157 = sshll.u32 [#allocation2], 4
      %s158 = int_to_ptr.vmem [resolvable:$true] %s157
      %s159 = sshll.u32 %s7, 4
      %s160 = int_to_ptr.hbm [resolvable:$true] %s159
      %162 = dma.vmem_to_hbm [thread:$0]  %s158, 128, %s160, [#allocation3]
    $region33: #{common_net_forward.1} parent=1 // pred_fallthru
      _
    // Predicated region
    $region34: #{common_net_forward.1} parent=1 // pred_check
      _
    $region35: #{common_net_forward.1} parent=1 // pred_check_branch
      %164 = sbr.rel (0) target = $region37
    $region36: #{common_net_forward.1} parent=1 // pred_region
      %166 = dma.done [#allocation3], 128
    $region37: #{common_net_forward.1} parent=1 // pred_fallthru
      _
    %167 = vsyncpa [#allocation3], 1

</llo_original>
